<compile_context>
chip_gen: v7x
topology: tpu7x:2x2x1
jax: 0.10.0
libtpu: 0.0.40
codegen_flags: <defaults>
</compile_context>

<pallas_src>
import jax
import jax.numpy as jnp
from jax.experimental import pallas as pl
from jax.experimental.pallas import tpu as pltpu

N_IN = 28 * 28      # 784
N_HIDDEN = 128
N_OUT = 10
_MIB = 1 << 20


def _cdiv(a, b):
    return -(-a // b)


def _round_up(x, m):
    return (x + m - 1) // m * m


def _lane_pad(n):
    return _round_up(n, 128)


def _vmem_bytes(tb, in_bytes):
    """Rough per-call VMEM footprint (2-deep buffers, lane-padded layouts)."""
    x_buf = 2 * tb * _lane_pad(N_IN) * in_bytes
    out_buf = 2 * tb * _lane_pad(N_OUT) * 4
    w_buf = 2 * (N_IN * _lane_pad(N_HIDDEN) * in_bytes
                 + _lane_pad(N_HIDDEN) * _lane_pad(N_OUT) * in_bytes
                 + 8 * _lane_pad(N_HIDDEN) * 4
                 + 8 * _lane_pad(N_OUT) * 4)
    tmp = 3 * tb * _lane_pad(N_HIDDEN) * 4   # h / logits / exp temporaries
    return x_buf + out_buf + w_buf + tmp


def ann_kernel(x_ref, w1_ref, b1_ref, w2_ref, b2_ref, o_ref):
    # x_ref:  (TILE_B, 784)   w1_ref: (784, 128)  b1_ref: (1, 128) f32
    # w2_ref: (128, 10)       b2_ref: (1, 10) f32 o_ref:  (TILE_B, 10) f32
    x = x_ref[...]

    # fc1 + bias + ReLU (MXU matmul, f32 accumulation).
    h = jnp.dot(x, w1_ref[...], preferred_element_type=jnp.float32) + b1_ref[...]
    h = jnp.maximum(h, 0.0)

    # fc2 + bias (cast h to the compute dtype so the MXU runs at full rate in
    # the bf16 path; no-op for f32).
    logits = jnp.dot(h.astype(w2_ref.dtype), w2_ref[...],
                     preferred_element_type=jnp.float32) + b2_ref[...]

    # log_softmax over the class axis (PyTorch dim=1), in f32.
    # NOTE: class dim stays 10-wide; masked stores / narrow XLU reductions are
    # second-order vs. the x HBM stream, so no 128-lane padding here.
    m = jnp.max(logits, axis=-1, keepdims=True)
    shifted = logits - m
    lse = jnp.log(jnp.sum(jnp.exp(shifted), axis=-1, keepdims=True))
    o_ref[...] = (shifted - lse).astype(o_ref.dtype)


def _ann_pallas(x2d, w1c, b1f, w2c, b2f, *, tb, n_tiles, vmem_limit):
    """One pallas_call over `n_tiles` full (tb, 784) tiles read from x2d.

    x2d may have MORE rows than n_tiles*tb; the extra rows are simply never
    visited by the grid (this is how the unaligned tail is excluded without a
    full-batch pad copy).
    """
    assert x2d.shape[0] >= n_tiles * tb
    return pl.pallas_call(
        ann_kernel,
        out_shape=jax.ShapeDtypeStruct((n_tiles * tb, N_OUT), jnp.float32),
        grid_spec=pltpu.PrefetchScalarGridSpec(
            num_scalar_prefetch=0,
            grid=(n_tiles,),
            in_specs=[
                # x: one batch tile per grid step (double-buffered by Pallas).
                pl.BlockSpec((tb, N_IN), lambda i: (i, 0)),
                # Weights / biases: same block every step -> stay VMEM-resident.
                pl.BlockSpec((N_IN, N_HIDDEN), lambda i: (0, 0)),
                pl.BlockSpec((1, N_HIDDEN), lambda i: (0, 0)),
                pl.BlockSpec((N_HIDDEN, N_OUT), lambda i: (0, 0)),
                pl.BlockSpec((1, N_OUT), lambda i: (0, 0)),
            ],
            out_specs=pl.BlockSpec((tb, N_OUT), lambda i: (i, 0)),
        ),
        compiler_params=pltpu.CompilerParams(
            # Batch tiles are independent -> shard across both TCs on v7x.
            dimension_semantics=("parallel",),
            vmem_limit_bytes=int(vmem_limit),
        ),
    )(x2d, w1c, b1f, w2c, b2f)


def ann_forward(x_nchw, w1, b1, w2, b2, *, tile_b=None, compute_dtype=None,
                min_tiles=2, vmem_budget=48 * _MIB):
    """x_nchw: (B, 1, 28, 28) -> (B, 10) log-probabilities (f32).

    compute_dtype=None (default): compute in x's own dtype (no wrapper-side
    cast of x -- feed bf16 from the data pipeline to halve the dominant HBM
    stream).  Accumulation and log-softmax are always f32.
    """
    B = x_nchw.shape[0]
    x2d = x_nchw.reshape(B, -1)            # torch.flatten(x, 1)

    cdt = jnp.dtype(x2d.dtype) if compute_dtype is None else jnp.dtype(compute_dtype)
    if x2d.dtype != cdt:
        # NOTE: this is a full extra read+write of x; prefer producing x in
        # `cdt` upstream so this branch is never taken.
        x2d = x2d.astype(cdt)
    in_bytes = cdt.itemsize

    w1c = w1.astype(cdt)
    w2c = w2.astype(cdt)
    b1f = b1.reshape(1, N_HIDDEN).astype(jnp.float32)
    b2f = b2.reshape(1, N_OUT).astype(jnp.float32)

    # ---- batch tile selection -------------------------------------------
    if tile_b is None:
        tile_b = 4096 if in_bytes <= 2 else 2048
    # At least `min_tiles` grid steps when the batch allows it (v7x 2-TC).
    tb = min(int(tile_b), _round_up(max(_cdiv(B, min_tiles), 1), 16))
    tb = max(_round_up(tb, 16), 16)
    # Shrink until the double-buffered footprint fits the VMEM budget (v5e).
    while _vmem_bytes(tb, in_bytes) > vmem_budget and tb > 256:
        tb = max(_round_up(tb // 2, 16), 16)
    vmem_limit = min(max(_vmem_bytes(tb, in_bytes) + 8 * _MIB, 32 * _MIB),
                     56 * _MIB)

    n_full = B // tb
    rem = B - n_full * tb

    outs = []
    if n_full > 0:
        # Full tiles stream straight out of x2d -- no padding copy of x.
        outs.append(_ann_pallas(x2d, w1c, b1f, w2c, b2f,
                                tb=tb, n_tiles=n_full, vmem_limit=vmem_limit))
    if rem > 0:
        # Tail (< tb rows): slice + pad traffic bounded by one tile.
        tb_t = _round_up(rem, 16)
        x_tail = x2d[n_full * tb:]
        if tb_t != rem:
            x_tail = jnp.pad(x_tail, ((0, tb_t - rem), (0, 0)))
        vmem_tail = min(max(_vmem_bytes(tb_t, in_bytes) + 8 * _MIB, 32 * _MIB),
                        56 * _MIB)
        out_tail = _ann_pallas(x_tail, w1c, b1f, w2c, b2f,
                               tb=tb_t, n_tiles=1, vmem_limit=vmem_tail)
        outs.append(out_tail[:rem])

    return outs[0] if len(outs) == 1 else jnp.concatenate(outs, axis=0)


def init_params(key):
    """Deterministic init mimicking torch.nn.Linear (uniform +/- 1/sqrt(fan_in))."""
    k1, k2, k3, k4 = jax.random.split(key, 4)
    bound1 = 1.0 / jnp.sqrt(N_IN)
    bound2 = 1.0 / jnp.sqrt(N_HIDDEN)
    w1 = jax.random.uniform(k1, (N_IN, N_HIDDEN), jnp.float32, -bound1, bound1)
    b1 = jax.random.uniform(k2, (N_HIDDEN,), jnp.float32, -bound1, bound1)
    w2 = jax.random.uniform(k3, (N_HIDDEN, N_OUT), jnp.float32, -bound2, bound2)
    b2 = jax.random.uniform(k4, (N_OUT,), jnp.float32, -bound2, bound2)
    return w1, b1, w2, b2


if __name__ == "__main__":
    key = jax.random.PRNGKey(0)
    k_x, k_x2, k_p = jax.random.split(key, 3)

    w1, b1, w2, b2 = init_params(k_p)

    def ref_fwd(x):
        xf = x.reshape(x.shape[0], -1).astype(jnp.float32)
        h = jnp.maximum(xf @ w1 + b1, 0.0)
        return jax.nn.log_softmax(h @ w2 + b2, axis=1)

    # 1) Tiny batch (single padded tile), f32 -- exact check.
    B = 2
    x = jax.random.normal(k_x, (B, 1, 28, 28), jnp.float32)
    out = jax.block_until_ready(ann_forward(x, w1, b1, w2, b2))
    assert out.shape == (B, 10)
    assert jnp.allclose(out, ref_fwd(x), atol=1e-5, rtol=1e-5)

    # 2) Multi-tile grid + unaligned tail (no full-batch pad; tail handled by
    #    a bounded second call), f32, forced small tile.
    B2 = 37
    x2 = jax.random.normal(k_x2, (B2, 1, 28, 28), jnp.float32)
    out2 = jax.block_until_ready(ann_forward(x2, w1, b1, w2, b2, tile_b=16))
    assert out2.shape == (B2, 10)
    assert jnp.allclose(out2, ref_fwd(x2), atol=1e-5, rtol=1e-5)

    # 3) bf16 path: x already arrives in bf16 (no wrapper-side cast pass).
    x_bf16 = x.astype(jnp.bfloat16)
    out_bf = jax.block_until_ready(ann_forward(x_bf16, w1, b1, w2, b2))
    assert out_bf.shape == (B, 10)
    assert jnp.allclose(out_bf, ref_fwd(x), atol=5e-2, rtol=5e-2)

    print("KERNEL_OK")
</pallas_src>

<mosaic_0001>
module attributes {stable_mosaic.version = 11 : i64} {
  func.func @ann_kernel(%arg0: i32, %arg1: memref<16x784xf32, #tpu.memory_space<vmem>>, %arg2: memref<784x128xf32, #tpu.memory_space<vmem>>, %arg3: memref<1x128xf32, #tpu.memory_space<vmem>>, %arg4: memref<128x10xf32, #tpu.memory_space<vmem>>, %arg5: memref<1x10xf32, #tpu.memory_space<vmem>>, %arg6: memref<16x10xf32, #tpu.memory_space<vmem>>) attributes {dimension_semantics = [#tpu.dimension_semantics<parallel>], iteration_bounds = array<i64: 1>, scalar_prefetch = 0 : i64, scratch_operands = 0 : i64, tpu.core_type = #tpu.core_type<tc>, window_params = [{transform_indices = @transform_0, window_bounds = array<i64: 16, 784>}, {pipeline_mode = #tpu.pipeline_mode<synchronous>, transform_indices = @transform_1, window_bounds = array<i64: 784, 128>}, {pipeline_mode = #tpu.pipeline_mode<synchronous>, transform_indices = @transform_2, window_bounds = array<i64: 1, 128>}, {pipeline_mode = #tpu.pipeline_mode<synchronous>, transform_indices = @transform_3, window_bounds = array<i64: 128, 10>}, {pipeline_mode = #tpu.pipeline_mode<synchronous>, transform_indices = @transform_4, window_bounds = array<i64: 1, 10>}, {transform_indices = @transform_5, window_bounds = array<i64: 16, 10>}]} {
    %c0 = arith.constant 0 : index
    %c0_0 = arith.constant 0 : index
    %0 = vector.load %arg1[%c0, %c0_0] : memref<16x784xf32, #tpu.memory_space<vmem>>, vector<16x784xf32>
    %c0_1 = arith.constant 0 : index
    %c0_2 = arith.constant 0 : index
    %1 = vector.load %arg2[%c0_1, %c0_2] : memref<784x128xf32, #tpu.memory_space<vmem>>, vector<784x128xf32>
    %cst = arith.constant dense<0.000000e+00> : vector<16x128xf32>
    %2 = tpu.matmul %0, %1, %cst {dimension_numbers = #tpu.dot_dimension_numbers<[1], [0], [0], [1], [0, 0, 1, 1], [], []>} : vector<16x784xf32>, vector<784x128xf32>, vector<16x128xf32> -> vector<16x128xf32>
    %c0_3 = arith.constant 0 : index
    %c0_4 = arith.constant 0 : index
    %3 = vector.load %arg3[%c0_3, %c0_4] : memref<1x128xf32, #tpu.memory_space<vmem>>, vector<1x128xf32>
    %4 = vector.broadcast %3 : vector<1x128xf32> to vector<16x128xf32>
    %5 = arith.addf %2, %4 : vector<16x128xf32>
    %cst_5 = arith.constant 0.000000e+00 : f32
    %6 = vector.broadcast %cst_5 : f32 to vector<16x128xf32>
    %7 = arith.maximumf %5, %6 : vector<16x128xf32>
    %c0_6 = arith.constant 0 : index
    %c0_7 = arith.constant 0 : index
    %8 = vector.load %arg4[%c0_6, %c0_7] : memref<128x10xf32, #tpu.memory_space<vmem>>, vector<128x10xf32>
    %cst_8 = arith.constant dense<0.000000e+00> : vector<16x10xf32>
    %9 = tpu.matmul %7, %8, %cst_8 {dimension_numbers = #tpu.dot_dimension_numbers<[1], [0], [0], [1], [0, 0, 1, 1], [], []>} : vector<16x128xf32>, vector<128x10xf32>, vector<16x10xf32> -> vector<16x10xf32>
    %c0_9 = arith.constant 0 : index
    %c0_10 = arith.constant 0 : index
    %10 = vector.load %arg5[%c0_9, %c0_10] : memref<1x10xf32, #tpu.memory_space<vmem>>, vector<1x10xf32>
    %11 = vector.broadcast %10 : vector<1x10xf32> to vector<16x10xf32>
    %12 = arith.addf %9, %11 : vector<16x10xf32>
    %cst_11 = arith.constant dense<0xFF800000> : vector<16xf32>
    %13 = vector.multi_reduction <maximumf>, %12, %cst_11 [1] : vector<16x10xf32> to vector<16xf32>
    %14 = vector.shape_cast %13 : vector<16xf32> to vector<16x1xf32>
    %15 = vector.broadcast %14 : vector<16x1xf32> to vector<16x10xf32>
    %16 = arith.subf %12, %15 : vector<16x10xf32>
    %17 = math.exp %16 : vector<16x10xf32>
    %cst_12 = arith.constant dense<0.000000e+00> : vector<16xf32>
    %18 = vector.multi_reduction <add>, %17, %cst_12 [1] : vector<16x10xf32> to vector<16xf32>
    %19 = vector.shape_cast %18 : vector<16xf32> to vector<16x1xf32>
    %20 = math.log %19 : vector<16x1xf32>
    %21 = vector.broadcast %20 : vector<16x1xf32> to vector<16x10xf32>
    %22 = arith.subf %16, %21 : vector<16x10xf32>
    %c0_13 = arith.constant 0 : index
    %c0_14 = arith.constant 0 : index
    %23 = vector.load %arg6[%c0_13, %c0_14] : memref<16x10xf32, #tpu.memory_space<vmem>>, vector<16x10xf32>
    tpu.vector_store %arg6[%c0_13, %c0_14], %22 {strides = array<i32>} : memref<16x10xf32, #tpu.memory_space<vmem>>, vector<16x10xf32>,
    return
  }
  func.func @transform_0(%arg0: i32) -> (i32, i32) {
    %c0_i32 = arith.constant 0 : i32
    %c0_i32_0 = arith.constant 0 : i32
    return %arg0, %c0_i32 : i32, i32
  }
  func.func @transform_1(%arg0: i32) -> (i32, i32) {
    %c0_i32 = arith.constant 0 : i32
    %c0_i32_0 = arith.constant 0 : i32
    %c0_i32_1 = arith.constant 0 : i32
    return %c0_i32, %c0_i32_0 : i32, i32
  }
  func.func @transform_2(%arg0: i32) -> (i32, i32) {
    %c0_i32 = arith.constant 0 : i32
    %c0_i32_0 = arith.constant 0 : i32
    %c0_i32_1 = arith.constant 0 : i32
    return %c0_i32, %c0_i32_0 : i32, i32
  }
  func.func @transform_3(%arg0: i32) -> (i32, i32) {
    %c0_i32 = arith.constant 0 : i32
    %c0_i32_0 = arith.constant 0 : i32
    %c0_i32_1 = arith.constant 0 : i32
    return %c0_i32, %c0_i32_0 : i32, i32
  }
  func.func @transform_4(%arg0: i32) -> (i32, i32) {
    %c0_i32 = arith.constant 0 : i32
    %c0_i32_0 = arith.constant 0 : i32
    %c0_i32_1 = arith.constant 0 : i32
    return %c0_i32, %c0_i32_0 : i32, i32
  }
  func.func @transform_5(%arg0: i32) -> (i32, i32) {
    %c0_i32 = arith.constant 0 : i32
    %c0_i32_0 = arith.constant 0 : i32
    return %arg0, %c0_i32 : i32, i32
  }
}

</mosaic_0001>

<llo_original>
// kernel: tpu_custom_call.1
$region0: #{tpu_custom_call.1}
  #allocation0 [shape = 'u32[]', space=smem, size = 0x4, offset = 0x4, fixed_abs, tag = 'smem constant byte address 0x4 - core index']
  #allocation1 [shape = 'u32[144,128]{1,0:T(1,128)}', space=vmem, size = 0x12000, scoped, tag = 'internal scratch']
  %s0 = inlined_call_operand.vmem [shape: f32[16,784], index: 0, kind: input, shape index: {}]
  %s1 = inlined_call_operand.hbm [shape: f32[784,128], index: 1, kind: input, shape index: {}]
  %s2 = inlined_call_operand.vmem [shape: f32[1,128], index: 2, kind: input, shape index: {}]
  %s3 = inlined_call_operand.vmem [shape: f32[128,10], index: 3, kind: input, shape index: {}]
  %s4 = inlined_call_operand.vmem [shape: f32[1,10], index: 4, kind: input, shape index: {}]
  %s5 = inlined_call_operand.hbm [shape: f32[16,10], index: 5, kind: output, shape index: {}]
  %s6 = sld [smem:[#allocation0]]
  $region34: #{tpu_custom_call.1} parent=0
    _
  %s8 = ssub.s32 1, %s6
  %s9 = scalar_select 0, %s8, %s6
  $region1: #{tpu_custom_call.1} parent=0
    #allocation2 [shape = 'u8[401408]{0}', space=vmem, size = 0x62000, scoped, tag = 'input window, operand 1, single buffered']
    #allocation3 [shape = 's32[1]{0}', space=sflag, size = 0x4, scoped, tag = 'scoped memory for tpu_custom_call.1']
    #allocation4 [shape = 's32[1]{0}', space=sflag, size = 0x4, scoped, tag = 'scoped memory for tpu_custom_call.1']
    #allocation5 [shape = 'u8[8192]{0}', space=vmem, size = 0x2000, scoped, tag = 'output window, operand 0, single buffered']
    %10 = vsyncpa [#allocation3], 0
    %11 = vsyncpa [#allocation4], 0
    // Predicated region
    $region2: #{tpu_custom_call.1} parent=1 // pred_check
      _
    $region3: #{tpu_custom_call.1} parent=1 // pred_check_branch
      %13 = sbr.rel (0) target = $region5
    $region4: #{tpu_custom_call.1} parent=1 // pred_region
      _
    $region5: #{tpu_custom_call.1} parent=1 // pred_fallthru
      _
    // Predicated region
    $region6: #{tpu_custom_call.1} parent=1 // pred_check
      _
    $region7: #{tpu_custom_call.1} parent=1 // pred_check_branch
      %15 = sbr.rel (0) target = $region9
    $region8: #{tpu_custom_call.1} parent=1 // pred_region
      %s17 = ssub.s32 12544, 12544
      %18 = vsyncadd [#allocation3], %s17
      %s19 = sshll.u32 [#allocation2], 4
      %s20 = int_to_ptr.vmem [resolvable:$true] %s19
      %25 = dma.hbm_to_vmem [thread:$0]  %s1, 12544, %s20, [#allocation3], 128, 128, 8
    $region9: #{tpu_custom_call.1} parent=1 // pred_fallthru
      _
    // Predicated region
    $region10: #{tpu_custom_call.1} parent=1 // pred_check
      _
    $region11: #{tpu_custom_call.1} parent=1 // pred_check_branch
      %27 = sbr.rel (0) target = $region13
    $region12: #{tpu_custom_call.1} parent=1 // pred_region
      _
    $region13: #{tpu_custom_call.1} parent=1 // pred_fallthru
      _
    // Predicated region
    $region14: #{tpu_custom_call.1} parent=1 // pred_check
      _
    $region15: #{tpu_custom_call.1} parent=1 // pred_check_branch
      %29 = sbr.rel (0) target = $region17
    $region16: #{tpu_custom_call.1} parent=1 // pred_region
      _
    $region17: #{tpu_custom_call.1} parent=1 // pred_fallthru
      _
    // Predicated region
    $region18: #{tpu_custom_call.1} parent=1 // pred_check
      _
    $region19: #{tpu_custom_call.1} parent=1 // pred_check_branch
      %31 = sbr.rel (0) target = $region21
    $region20: #{tpu_custom_call.1} parent=1 // pred_region
      _
    $region21: #{tpu_custom_call.1} parent=1 // pred_fallthru
      _
    // Predicated region
    $region22: #{tpu_custom_call.1} parent=1 // pred_check
      _
    $region23: #{tpu_custom_call.1} parent=1 // pred_check_branch
      %33 = sbr.rel (0) target = $region25
    $region24: #{tpu_custom_call.1} parent=1 // pred_region
      %34 = dma.done [#allocation3], 12544
    $region25: #{tpu_custom_call.1} parent=1 // pred_fallthru
      _
    %v35 = vld [vmem:[%s0] sm:$0xff]
    %v36 = vld [vmem:[%s0 + $0x8] sm:$0xff]
    %v37 = vld [vmem:[%s0 + $0x10] sm:$0xff]
    %v38 = vld [vmem:[%s0 + $0x18] sm:$0xff]
    %v39 = vld [vmem:[%s0 + $0x20] sm:$0xff]
    %v40 = vld [vmem:[%s0 + $0x28] sm:$0xff]
    %v41 = vld [vmem:[%s0 + $0x30] sm:$0xff]
    %v42 = vld [vmem:[%s0 + $0x38] sm:$0xff]
    %v43 = vld [vmem:[%s0 + $0x40] sm:$0xff]
    %v44 = vld [vmem:[%s0 + $0x48] sm:$0xff]
    %v45 = vld [vmem:[%s0 + $0x50] sm:$0xff]
    %v46 = vld [vmem:[%s0 + $0x58] sm:$0xff]
    %v47 = vld [vmem:[%s0 + $0x60] sm:$0xff]
    %v48 = vld [vmem:[%s0 + $0x68] sm:$0xff]
    %v49 = vld [vmem:[#allocation2] sm:$0xff]
    %v50 = vld [vmem:[#allocation2 + $0x8] sm:$0xff]
    %v51 = vld [vmem:[#allocation2 + $0x10] sm:$0xff]
    %v52 = vld [vmem:[#allocation2 + $0x18] sm:$0xff]
    %v53 = vld [vmem:[#allocation2 + $0x20] sm:$0xff]
    %v54 = vld [vmem:[#allocation2 + $0x28] sm:$0xff]
    %v55 = vld [vmem:[#allocation2 + $0x30] sm:$0xff]
    %v56 = vld [vmem:[#allocation2 + $0x38] sm:$0xff]
    %v57 = vld [vmem:[#allocation2 + $0x40] sm:$0xff]
    %v58 = vld [vmem:[#allocation2 + $0x48] sm:$0xff]
    %v59 = vld [vmem:[#allocation2 + $0x50] sm:$0xff]
    %v60 = vld [vmem:[#allocation2 + $0x58] sm:$0xff]
    %v61 = vld [vmem:[#allocation2 + $0x60] sm:$0xff]
    %v62 = vld [vmem:[#allocation2 + $0x68] sm:$0xff]
    %v63 = vld [vmem:[#allocation2 + $0x70] sm:$0xff]
    %v64 = vld [vmem:[#allocation2 + $0x78] sm:$0xff]
    %v65 = vld [vmem:[#allocation2 + $0x80] sm:$0xff]
    %v66 = vld [vmem:[#allocation2 + $0x88] sm:$0xff]
    %v67 = vld [vmem:[#allocation2 + $0x90] sm:$0xff]
    %v68 = vld [vmem:[#allocation2 + $0x98] sm:$0xff]
    %v69 = vld [vmem:[#allocation2 + $0xa0] sm:$0xff]
    %v70 = vld [vmem:[#allocation2 + $0xa8] sm:$0xff]
    %v71 = vld [vmem:[#allocation2 + $0xb0] sm:$0xff]
    %v72 = vld [vmem:[#allocation2 + $0xb8] sm:$0xff]
    %v73 = vld [vmem:[#allocation2 + $0xc0] sm:$0xff]
    %v74 = vld [vmem:[#allocation2 + $0xc8] sm:$0xff]
    %v75 = vld [vmem:[#allocation2 + $0xd0] sm:$0xff]
    %v76 = vld [vmem:[#allocation2 + $0xd8] sm:$0xff]
    %v77 = vld [vmem:[#allocation2 + $0xe0] sm:$0xff]
    %v78 = vld [vmem:[#allocation2 + $0xe8] sm:$0xff]
    %v79 = vld [vmem:[#allocation2 + $0xf0] sm:$0xff]
    %v80 = vld [vmem:[#allocation2 + $0xf8] sm:$0xff]
    %v81 = vld [vmem:[#allocation2 + $0x100] sm:$0xff]
    %v82 = vld [vmem:[#allocation2 + $0x108] sm:$0xff]
    %v83 = vld [vmem:[#allocation2 + $0x110] sm:$0xff]
    %v84 = vld [vmem:[#allocation2 + $0x118] sm:$0xff]
    %v85 = vld [vmem:[#allocation2 + $0x120] sm:$0xff]
    %v86 = vld [vmem:[#allocation2 + $0x128] sm:$0xff]
    %v87 = vld [vmem:[#allocation2 + $0x130] sm:$0xff]
    %v88 = vld [vmem:[#allocation2 + $0x138] sm:$0xff]
    %v89 = vld [vmem:[#allocation2 + $0x140] sm:$0xff]
    %v90 = vld [vmem:[#allocation2 + $0x148] sm:$0xff]
    %v91 = vld [vmem:[#allocation2 + $0x150] sm:$0xff]
    %v92 = vld [vmem:[#allocation2 + $0x158] sm:$0xff]
    %v93 = vld [vmem:[#allocation2 + $0x160] sm:$0xff]
    %v94 = vld [vmem:[#allocation2 + $0x168] sm:$0xff]
    %v95 = vld [vmem:[#allocation2 + $0x170] sm:$0xff]
    %v96 = vld [vmem:[#allocation2 + $0x178] sm:$0xff]
    %v97 = vld [vmem:[#allocation2 + $0x180] sm:$0xff]
    %v98 = vld [vmem:[#allocation2 + $0x188] sm:$0xff]
    %v99 = vld [vmem:[#allocation2 + $0x190] sm:$0xff]
    %v100 = vld [vmem:[#allocation2 + $0x198] sm:$0xff]
    %v101 = vld [vmem:[#allocation2 + $0x1a0] sm:$0xff]
    %v102 = vld [vmem:[#allocation2 + $0x1a8] sm:$0xff]
    %v103 = vld [vmem:[#allocation2 + $0x1b0] sm:$0xff]
    %v104 = vld [vmem:[#allocation2 + $0x1b8] sm:$0xff]
    %v105 = vld [vmem:[#allocation2 + $0x1c0] sm:$0xff]
    %v106 = vld [vmem:[#allocation2 + $0x1c8] sm:$0xff]
    %v107 = vld [vmem:[#allocation2 + $0x1d0] sm:$0xff]
    %v108 = vld [vmem:[#allocation2 + $0x1d8] sm:$0xff]
    %v109 = vld [vmem:[#allocation2 + $0x1e0] sm:$0xff]
    %v110 = vld [vmem:[#allocation2 + $0x1e8] sm:$0xff]
    %v111 = vld [vmem:[#allocation2 + $0x1f0] sm:$0xff]
    %v112 = vld [vmem:[#allocation2 + $0x1f8] sm:$0xff]
    %v113 = vld [vmem:[#allocation2 + $0x200] sm:$0xff]
    %v114 = vld [vmem:[#allocation2 + $0x208] sm:$0xff]
    %v115 = vld [vmem:[#allocation2 + $0x210] sm:$0xff]
    %v116 = vld [vmem:[#allocation2 + $0x218] sm:$0xff]
    %v117 = vld [vmem:[#allocation2 + $0x220] sm:$0xff]
    %v118 = vld [vmem:[#allocation2 + $0x228] sm:$0xff]
    %v119 = vld [vmem:[#allocation2 + $0x230] sm:$0xff]
    %v120 = vld [vmem:[#allocation2 + $0x238] sm:$0xff]
    %v121 = vld [vmem:[#allocation2 + $0x240] sm:$0xff]
    %v122 = vld [vmem:[#allocation2 + $0x248] sm:$0xff]
    %v123 = vld [vmem:[#allocation2 + $0x250] sm:$0xff]
    %v124 = vld [vmem:[#allocation2 + $0x258] sm:$0xff]
    %v125 = vld [vmem:[#allocation2 + $0x260] sm:$0xff]
    %v126 = vld [vmem:[#allocation2 + $0x268] sm:$0xff]
    %v127 = vld [vmem:[#allocation2 + $0x270] sm:$0xff]
    %v128 = vld [vmem:[#allocation2 + $0x278] sm:$0xff]
    %v129 = vld [vmem:[#allocation2 + $0x280] sm:$0xff]
    %v130 = vld [vmem:[#allocation2 + $0x288] sm:$0xff]
    %v131 = vld [vmem:[#allocation2 + $0x290] sm:$0xff]
    %v132 = vld [vmem:[#allocation2 + $0x298] sm:$0xff]
    %v133 = vld [vmem:[#allocation2 + $0x2a0] sm:$0xff]
    %v134 = vld [vmem:[#allocation2 + $0x2a8] sm:$0xff]
    %v135 = vld [vmem:[#allocation2 + $0x2b0] sm:$0xff]
    %v136 = vld [vmem:[#allocation2 + $0x2b8] sm:$0xff]
    %v137 = vld [vmem:[#allocation2 + $0x2c0] sm:$0xff]
    %v138 = vld [vmem:[#allocation2 + $0x2c8] sm:$0xff]
    %v139 = vld [vmem:[#allocation2 + $0x2d0] sm:$0xff]
    %v140 = vld [vmem:[#allocation2 + $0x2d8] sm:$0xff]
    %v141 = vld [vmem:[#allocation2 + $0x2e0] sm:$0xff]
    %v142 = vld [vmem:[#allocation2 + $0x2e8] sm:$0xff]
    %v143 = vld [vmem:[#allocation2 + $0x2f0] sm:$0xff]
    %v144 = vld [vmem:[#allocation2 + $0x2f8] sm:$0xff]
    %v145 = vld [vmem:[#allocation2 + $0x300] sm:$0xff]
    %v146 = vld [vmem:[#allocation2 + $0x308] sm:$0xff]
    %v147 = vld [vmem:[%s2] sm:$0x1]
    %v149 = vlaneseq
    %v150 = vshrl.u32 %v149, 7
    %v151 = vsub.s32 0, %v150
    %v152 = vrot.slane %v147, %v151
    %vm154 = vcmask 130048
    %v156 = vsel %vm154, %v41, 0
    %v159 = vsel %vm154, %v48, 0
    %161 = vmatprep.subr.mxu0 0.0
    %162 = vmatpush1.msra.mxu0 %v49
    %163 = vmatprep.subr.mxu0 0.0
    %164 = vmatpush1.msra.mxu0 %v50
    %165 = vmatprep.subr.mxu0 0.0
    %166 = vmatpush1.msra.mxu0 %v51
    %167 = vmatprep.subr.mxu0 0.0
    %168 = vmatpush1.msra.mxu0 %v52
    %169 = vmatprep.subr.mxu0 0.0
    %170 = vmatpush1.msra.mxu0 %v53
    %171 = vmatprep.subr.mxu0 0.0
    %172 = vmatpush1.msra.mxu0 %v54
    %173 = vmatprep.subr.mxu0 0.0
    %174 = vmatpush1.msra.mxu0 %v55
    %175 = vmatprep.subr.mxu0 0.0
    %176 = vmatpush1.msra.mxu0 %v56
    %177 = vmatprep.subr.mxu0 0.0
    %178 = vmatpush1.msra.mxu0 %v57
    %179 = vmatprep.subr.mxu0 0.0
    %180 = vmatpush1.msra.mxu0 %v58
    %181 = vmatprep.subr.mxu0 0.0
    %182 = vmatpush1.msra.mxu0 %v59
    %183 = vmatprep.subr.mxu0 0.0
    %184 = vmatpush1.msra.mxu0 %v60
    %185 = vmatprep.subr.mxu0 0.0
    %186 = vmatpush1.msra.mxu0 %v61
    %187 = vmatprep.subr.mxu0 0.0
    %188 = vmatpush1.msra.mxu0 %v62
    %189 = vmatprep.subr.mxu0 0.0
    %190 = vmatpush1.msra.mxu0 %v63
    %191 = vmatprep.subr.mxu0 0.0
    %192 = vmatpush1.msra.mxu0 %v64
    %193 = vmatprep.subr.mxu0 0.0
    %194 = vmatpush1.msra.mxu0 %v65
    %195 = vmatprep.subr.mxu0 0.0
    %196 = vmatpush1.msra.mxu0 %v66
    %197 = vmatprep.subr.mxu0 0.0
    %198 = vmatpush1.msra.mxu0 %v67
    %199 = vmatprep.subr.mxu0 0.0
    %200 = vmatpush1.msra.mxu0 %v68
    %201 = vmatprep.subr.mxu0 0.0
    %202 = vmatpush1.msra.mxu0 %v69
    %203 = vmatprep.subr.mxu0 0.0
    %204 = vmatpush1.msra.mxu0 %v70
    %205 = vmatprep.subr.mxu0 0.0
    %206 = vmatpush1.msra.mxu0 %v71
    %207 = vmatprep.subr.mxu0 0.0
    %208 = vmatpush1.msra.mxu0 %v72
    %209 = vmatprep.subr.mxu0 0.0
    %210 = vmatpush1.msra.mxu0 %v73
    %211 = vmatprep.subr.mxu0 0.0
    %212 = vmatpush1.msra.mxu0 %v74
    %213 = vmatprep.subr.mxu0 0.0
    %214 = vmatpush1.msra.mxu0 %v75
    %215 = vmatprep.subr.mxu0 0.0
    %216 = vmatpush1.msra.mxu0 %v76
    %217 = vmatprep.subr.mxu0 0.0
    %218 = vmatpush1.msra.mxu0 %v77
    %219 = vmatprep.subr.mxu0 0.0
    %220 = vmatpush1.msra.mxu0 %v78
    %221 = vmatprep.subr.mxu0 0.0
    %222 = vmatpush1.msra.mxu0 %v79
    %223 = vmatprep.subr.mxu0 0.0
    %224 = vmatpush1.msra.mxu0 %v80
    %225 = vmatprep.mubr.f32.mxu0 %v36
    %226 = vmatmul.mubr.f32.gmra.mrb[0].mxu0 %v35
    %v227 = vpop.f32.mrb[0].mxu0
    %v228 = vadd.f32 %v152, %v227
    %v229 = vpop.f32.mrb[0].mxu0
    %230 = vmatprep.mubr.f32.mxu0 %v43
    %231 = vmatmul.mubr.f32.gmra.mrb[0].mxu0 %v42
    %v232 = vpop.f32.mrb[0].mxu0
    %v233 = vadd.f32 %v152, %v232
    %v234 = vpop.f32.mrb[0].mxu0
    %235 = vdwg.mxu0
    %236 = vmatprep.subr.mxu0 0.0
    %237 = vmatpush1.msra.mxu0 %v81
    %238 = vmatprep.subr.mxu0 0.0
    %239 = vmatpush1.msra.mxu0 %v82
    %240 = vmatprep.subr.mxu0 0.0
    %241 = vmatpush1.msra.mxu0 %v83
    %242 = vmatprep.subr.mxu0 0.0
    %243 = vmatpush1.msra.mxu0 %v84
    %244 = vmatprep.subr.mxu0 0.0
    %245 = vmatpush1.msra.mxu0 %v85
    %246 = vmatprep.subr.mxu0 0.0
    %247 = vmatpush1.msra.mxu0 %v86
    %248 = vmatprep.subr.mxu0 0.0
    %249 = vmatpush1.msra.mxu0 %v87
    %250 = vmatprep.subr.mxu0 0.0
    %251 = vmatpush1.msra.mxu0 %v88
    %252 = vmatprep.subr.mxu0 0.0
    %253 = vmatpush1.msra.mxu0 %v89
    %254 = vmatprep.subr.mxu0 0.0
    %255 = vmatpush1.msra.mxu0 %v90
    %256 = vmatprep.subr.mxu0 0.0
    %257 = vmatpush1.msra.mxu0 %v91
    %258 = vmatprep.subr.mxu0 0.0
    %259 = vmatpush1.msra.mxu0 %v92
    %260 = vmatprep.subr.mxu0 0.0
    %261 = vmatpush1.msra.mxu0 %v93
    %262 = vmatprep.subr.mxu0 0.0
    %263 = vmatpush1.msra.mxu0 %v94
    %264 = vmatprep.subr.mxu0 0.0
    %265 = vmatpush1.msra.mxu0 %v95
    %266 = vmatprep.subr.mxu0 0.0
    %267 = vmatpush1.msra.mxu0 %v96
    %268 = vmatprep.subr.mxu0 0.0
    %269 = vmatpush1.msra.mxu0 %v97
    %270 = vmatprep.subr.mxu0 0.0
    %271 = vmatpush1.msra.mxu0 %v98
    %272 = vmatprep.subr.mxu0 0.0
    %273 = vmatpush1.msra.mxu0 %v99
    %274 = vmatprep.subr.mxu0 0.0
    %275 = vmatpush1.msra.mxu0 %v100
    %276 = vmatprep.subr.mxu0 0.0
    %277 = vmatpush1.msra.mxu0 %v101
    %278 = vmatprep.subr.mxu0 0.0
    %279 = vmatpush1.msra.mxu0 %v102
    %280 = vmatprep.subr.mxu0 0.0
    %281 = vmatpush1.msra.mxu0 %v103
    %282 = vmatprep.subr.mxu0 0.0
    %283 = vmatpush1.msra.mxu0 %v104
    %284 = vmatprep.subr.mxu0 0.0
    %285 = vmatpush1.msra.mxu0 %v105
    %286 = vmatprep.subr.mxu0 0.0
    %287 = vmatpush1.msra.mxu0 %v106
    %288 = vmatprep.subr.mxu0 0.0
    %289 = vmatpush1.msra.mxu0 %v107
    %290 = vmatprep.subr.mxu0 0.0
    %291 = vmatpush1.msra.mxu0 %v108
    %292 = vmatprep.subr.mxu0 0.0
    %293 = vmatpush1.msra.mxu0 %v109
    %294 = vmatprep.subr.mxu0 0.0
    %295 = vmatpush1.msra.mxu0 %v110
    %296 = vmatprep.subr.mxu0 0.0
    %297 = vmatpush1.msra.mxu0 %v111
    %298 = vmatprep.subr.mxu0 0.0
    %299 = vmatpush1.msra.mxu0 %v112
    %300 = vmatprep.mubr.f32.mxu0 %v38
    %301 = vmatmul.mubr.f32.gmra.mrb[0].mxu0 %v37
    %v302 = vpop.f32.mrb[0].mxu0
    %v303 = vadd.f32 %v228, %v302
    %v304 = vpop.f32.mrb[0].mxu0
    %305 = vmatprep.mubr.f32.mxu0 %v45
    %306 = vmatmul.mubr.f32.gmra.mrb[0].mxu0 %v44
    %v307 = vpop.f32.mrb[0].mxu0
    %v308 = vadd.f32 %v233, %v307
    %v309 = vpop.f32.mrb[0].mxu0
    %310 = vdwg.mxu0
    %311 = vmatprep.subr.mxu0 0.0
    %312 = vmatpush1.msra.mxu0 %v113
    %313 = vmatprep.subr.mxu0 0.0
    %314 = vmatpush1.msra.mxu0 %v114
    %315 = vmatprep.subr.mxu0 0.0
    %316 = vmatpush1.msra.mxu0 %v115
    %317 = vmatprep.subr.mxu0 0.0
    %318 = vmatpush1.msra.mxu0 %v116
    %319 = vmatprep.subr.mxu0 0.0
    %320 = vmatpush1.msra.mxu0 %v117
    %321 = vmatprep.subr.mxu0 0.0
    %322 = vmatpush1.msra.mxu0 %v118
    %323 = vmatprep.subr.mxu0 0.0
    %324 = vmatpush1.msra.mxu0 %v119
    %325 = vmatprep.subr.mxu0 0.0
    %326 = vmatpush1.msra.mxu0 %v120
    %327 = vmatprep.subr.mxu0 0.0
    %328 = vmatpush1.msra.mxu0 %v121
    %329 = vmatprep.subr.mxu0 0.0
    %330 = vmatpush1.msra.mxu0 %v122
    %331 = vmatprep.subr.mxu0 0.0
    %332 = vmatpush1.msra.mxu0 %v123
    %333 = vmatprep.subr.mxu0 0.0
    %334 = vmatpush1.msra.mxu0 %v124
    %335 = vmatprep.subr.mxu0 0.0
    %336 = vmatpush1.msra.mxu0 %v125
    %337 = vmatprep.subr.mxu0 0.0
    %338 = vmatpush1.msra.mxu0 %v126
    %339 = vmatprep.subr.mxu0 0.0
    %340 = vmatpush1.msra.mxu0 %v127
    %341 = vmatprep.subr.mxu0 0.0
    %342 = vmatpush1.msra.mxu0 %v128
    %343 = vmatprep.subr.mxu0 0.0
    %344 = vmatpush1.msra.mxu0 %v129
    %345 = vmatprep.subr.mxu0 0.0
    %346 = vmatpush1.msra.mxu0 %v130
    %347 = vmatprep.subr.mxu0 0.0
    %348 = vmatpush1.msra.mxu0 %v131
    %349 = vmatprep.subr.mxu0 0.0
    %350 = vmatpush1.msra.mxu0 %v132
    %351 = vmatprep.subr.mxu0 0.0
    %352 = vmatpush1.msra.mxu0 %v133
    %353 = vmatprep.subr.mxu0 0.0
    %354 = vmatpush1.msra.mxu0 %v134
    %355 = vmatprep.subr.mxu0 0.0
    %356 = vmatpush1.msra.mxu0 %v135
    %357 = vmatprep.subr.mxu0 0.0
    %358 = vmatpush1.msra.mxu0 %v136
    %359 = vmatprep.subr.mxu0 0.0
    %360 = vmatpush1.msra.mxu0 %v137
    %361 = vmatprep.subr.mxu0 0.0
    %362 = vmatpush1.msra.mxu0 %v138
    %363 = vmatprep.subr.mxu0 0.0
    %364 = vmatpush1.msra.mxu0 %v139
    %365 = vmatprep.subr.mxu0 0.0
    %366 = vmatpush1.msra.mxu0 %v140
    %367 = vmatprep.subr.mxu0 0.0
    %368 = vmatpush1.msra.mxu0 %v141
    %369 = vmatprep.subr.mxu0 0.0
    %370 = vmatpush1.msra.mxu0 %v142
    %371 = vmatprep.subr.mxu0 0.0
    %372 = vmatpush1.msra.mxu0 %v143
    %373 = vmatprep.subr.mxu0 0.0
    %374 = vmatpush1.msra.mxu0 %v144
    %375 = vmatprep.mubr.f32.mxu0 %v40
    %376 = vmatmul.mubr.f32.gmra.mrb[0].mxu0 %v39
    %v377 = vpop.f32.mrb[0].mxu0
    %v378 = vadd.f32 %v303, %v377
    %v379 = vpop.f32.mrb[0].mxu0
    %380 = vmatprep.mubr.f32.mxu0 %v47
    %381 = vmatmul.mubr.f32.gmra.mrb[0].mxu0 %v46
    %v382 = vpop.f32.mrb[0].mxu0
    %v383 = vadd.f32 %v308, %v382
    %v384 = vpop.f32.mrb[0].mxu0
    %385 = vdwg.mxu0
    %386 = vmatprep.subr.mxu0 0.0
    %387 = vmatpush1.msra.mxu0 %v145
    %388 = vmatprep.subr.mxu0 0.0
    %389 = vmatpush1.msra.mxu0 %v146
    %390 = vmatprep.subr.mxu0 0.0
    %391 = vmatpush1.msra.mxu0 0.0
    %392 = vmatprep.subr.mxu0 0.0
    %393 = vmatpush1.msra.mxu0 0.0
    %394 = vmatprep.subr.mxu0 0.0
    %395 = vmatpush1.msra.mxu0 0.0
    %396 = vmatprep.subr.mxu0 0.0
    %397 = vmatpush1.msra.mxu0 0.0
    %398 = vmatprep.subr.mxu0 0.0
    %399 = vmatpush1.msra.mxu0 0.0
    %400 = vmatprep.subr.mxu0 0.0
    %401 = vmatpush1.msra.mxu0 0.0
    %402 = vmatprep.subr.mxu0 0.0
    %403 = vmatpush1.msra.mxu0 0.0
    %404 = vmatprep.subr.mxu0 0.0
    %405 = vmatpush1.msra.mxu0 0.0
    %406 = vmatprep.subr.mxu0 0.0
    %407 = vmatpush1.msra.mxu0 0.0
    %408 = vmatprep.subr.mxu0 0.0
    %409 = vmatpush1.msra.mxu0 0.0
    %410 = vmatprep.subr.mxu0 0.0
    %411 = vmatpush1.msra.mxu0 0.0
    %412 = vmatprep.subr.mxu0 0.0
    %413 = vmatpush1.msra.mxu0 0.0
    %414 = vmatprep.subr.mxu0 0.0
    %415 = vmatpush1.msra.mxu0 0.0
    %416 = vmatprep.subr.mxu0 0.0
    %417 = vmatpush1.msra.mxu0 0.0
    %418 = vmatprep.subr.mxu0 0.0
    %419 = vmatpush1.msra.mxu0 0.0
    %420 = vmatprep.subr.mxu0 0.0
    %421 = vmatpush1.msra.mxu0 0.0
    %422 = vmatprep.subr.mxu0 0.0
    %423 = vmatpush1.msra.mxu0 0.0
    %424 = vmatprep.subr.mxu0 0.0
    %425 = vmatpush1.msra.mxu0 0.0
    %426 = vmatprep.subr.mxu0 0.0
    %427 = vmatpush1.msra.mxu0 0.0
    %428 = vmatprep.subr.mxu0 0.0
    %429 = vmatpush1.msra.mxu0 0.0
    %430 = vmatprep.subr.mxu0 0.0
    %431 = vmatpush1.msra.mxu0 0.0
    %432 = vmatprep.subr.mxu0 0.0
    %433 = vmatpush1.msra.mxu0 0.0
    %434 = vmatprep.subr.mxu0 0.0
    %435 = vmatpush1.msra.mxu0 0.0
    %436 = vmatprep.subr.mxu0 0.0
    %437 = vmatpush1.msra.mxu0 0.0
    %438 = vmatprep.subr.mxu0 0.0
    %439 = vmatpush1.msra.mxu0 0.0
    %440 = vmatprep.subr.mxu0 0.0
    %441 = vmatpush1.msra.mxu0 0.0
    %442 = vmatprep.subr.mxu0 0.0
    %443 = vmatpush1.msra.mxu0 0.0
    %444 = vmatprep.subr.mxu0 0.0
    %445 = vmatpush1.msra.mxu0 0.0
    %446 = vmatprep.subr.mxu0 0.0
    %447 = vmatpush1.msra.mxu0 0.0
    %448 = vmatprep.subr.mxu0 0.0
    %449 = vmatpush1.msra.mxu0 0.0
    %450 = vmatprep.mubr.f32.mxu0 0.0
    %451 = vmatmul.mubr.f32.gmra.mrb[0].mxu0 %v156
    %v452 = vpop.f32.mrb[0].mxu0
    %v453 = vadd.f32 %v378, %v452
    %v454 = vpop.f32.mrb[0].mxu0
    %455 = vmatprep.mubr.f32.mxu0 0.0
    %456 = vmatmul.mubr.f32.gmra.mrb[0].mxu0 %v159
    %v457 = vpop.f32.mrb[0].mxu0
    %v458 = vadd.f32 %v383, %v457
    %v459 = vpop.f32.mrb[0].mxu0
    %460 = vdwg.mxu0
    %v461 = vmax.f32 %v453, 0.0
    %v462 = vmax.f32 %v458, 0.0
    %v463 = vld [vmem:[%s3] sm:$0xff]
    %v464 = vld [vmem:[%s3 + $0x8] sm:$0xff]
    %v465 = vld [vmem:[%s3 + $0x10] sm:$0xff]
    %v466 = vld [vmem:[%s3 + $0x18] sm:$0xff]
    %v467 = vld [vmem:[%s3 + $0x20] sm:$0xff]
    %v468 = vld [vmem:[%s3 + $0x28] sm:$0xff]
    %v469 = vld [vmem:[%s3 + $0x30] sm:$0xff]
    %v470 = vld [vmem:[%s3 + $0x38] sm:$0xff]
    %v471 = vld [vmem:[%s3 + $0x40] sm:$0xff]
    %v472 = vld [vmem:[%s3 + $0x48] sm:$0xff]
    %v473 = vld [vmem:[%s3 + $0x50] sm:$0xff]
    %v474 = vld [vmem:[%s3 + $0x58] sm:$0xff]
    %v475 = vld [vmem:[%s3 + $0x60] sm:$0xff]
    %v476 = vld [vmem:[%s3 + $0x68] sm:$0xff]
    %v477 = vld [vmem:[%s3 + $0x70] sm:$0xff]
    %v478 = vld [vmem:[%s3 + $0x78] sm:$0xff]
    %v479 = vld [vmem:[%s4] sm:$0x1]
    %v481 = vlaneseq
    %v482 = vshrl.u32 %v481, 7
    %v483 = vsub.s32 0, %v482
    %v484 = vrot.slane %v479, %v483
    %486 = vmatprep.subr.mxu0 0.0
    %487 = vmatpush1.msra.mxu0 %v463
    %488 = vmatprep.subr.mxu0 0.0
    %489 = vmatpush1.msra.mxu0 %v464
    %490 = vmatprep.subr.mxu0 0.0
    %491 = vmatpush1.msra.mxu0 %v465
    %492 = vmatprep.subr.mxu0 0.0
    %493 = vmatpush1.msra.mxu0 %v466
    %494 = vmatprep.subr.mxu0 0.0
    %495 = vmatpush1.msra.mxu0 %v467
    %496 = vmatprep.subr.mxu0 0.0
    %497 = vmatpush1.msra.mxu0 %v468
    %498 = vmatprep.subr.mxu0 0.0
    %499 = vmatpush1.msra.mxu0 %v469
    %500 = vmatprep.subr.mxu0 0.0
    %501 = vmatpush1.msra.mxu0 %v470
    %502 = vmatprep.subr.mxu0 0.0
    %503 = vmatpush1.msra.mxu0 %v471
    %504 = vmatprep.subr.mxu0 0.0
    %505 = vmatpush1.msra.mxu0 %v472
    %506 = vmatprep.subr.mxu0 0.0
    %507 = vmatpush1.msra.mxu0 %v473
    %508 = vmatprep.subr.mxu0 0.0
    %509 = vmatpush1.msra.mxu0 %v474
    %510 = vmatprep.subr.mxu0 0.0
    %511 = vmatpush1.msra.mxu0 %v475
    %512 = vmatprep.subr.mxu0 0.0
    %513 = vmatpush1.msra.mxu0 %v476
    %514 = vmatprep.subr.mxu0 0.0
    %515 = vmatpush1.msra.mxu0 %v477
    %516 = vmatprep.subr.mxu0 0.0
    %517 = vmatpush1.msra.mxu0 %v478
    %518 = vmatprep.subr.mxu0 0.0
    %519 = vmatpush1.msra.mxu0 0.0
    %520 = vmatprep.subr.mxu0 0.0
    %521 = vmatpush1.msra.mxu0 0.0
    %522 = vmatprep.subr.mxu0 0.0
    %523 = vmatpush1.msra.mxu0 0.0
    %524 = vmatprep.subr.mxu0 0.0
    %525 = vmatpush1.msra.mxu0 0.0
    %526 = vmatprep.subr.mxu0 0.0
    %527 = vmatpush1.msra.mxu0 0.0
    %528 = vmatprep.subr.mxu0 0.0
    %529 = vmatpush1.msra.mxu0 0.0
    %530 = vmatprep.subr.mxu0 0.0
    %531 = vmatpush1.msra.mxu0 0.0
    %532 = vmatprep.subr.mxu0 0.0
    %533 = vmatpush1.msra.mxu0 0.0
    %534 = vmatprep.subr.mxu0 0.0
    %535 = vmatpush1.msra.mxu0 0.0
    %536 = vmatprep.subr.mxu0 0.0
    %537 = vmatpush1.msra.mxu0 0.0
    %538 = vmatprep.subr.mxu0 0.0
    %539 = vmatpush1.msra.mxu0 0.0
    %540 = vmatprep.subr.mxu0 0.0
    %541 = vmatpush1.msra.mxu0 0.0
    %542 = vmatprep.subr.mxu0 0.0
    %543 = vmatpush1.msra.mxu0 0.0
    %544 = vmatprep.subr.mxu0 0.0
    %545 = vmatpush1.msra.mxu0 0.0
    %546 = vmatprep.subr.mxu0 0.0
    %547 = vmatpush1.msra.mxu0 0.0
    %548 = vmatprep.subr.mxu0 0.0
    %549 = vmatpush1.msra.mxu0 0.0
    %550 = vmatprep.mubr.f32.mxu0 0.0
    %551 = vmatmul.mubr.f32.gmra.mrb[0].mxu0 %v461
    %v552 = vpop.f32.mrb[0].mxu0
    %v553 = vadd.f32 %v484, %v552
    %v554 = vpop.f32.mrb[0].mxu0
    %555 = vmatprep.mubr.f32.mxu0 0.0
    %556 = vmatmul.mubr.f32.gmra.mrb[0].mxu0 %v462
    %v557 = vpop.f32.mrb[0].mxu0
    %v558 = vadd.f32 %v484, %v557
    %v559 = vpop.f32.mrb[0].mxu0
    %560 = vdwg.mxu0
    %vm561 = vcmask 80896
    %v562 = vsel %vm561, %v553, -inf
    %563 = vmax.xlane.f32.xlu0 %v562
    %v564 = vpop.xlane.xlu0 %563
    %v565 = vsel %vm561, %v558, -inf
    %566 = vmax.xlane.f32.xlu0 %v565
    %v567 = vpop.xlane.xlu0 %566
    %v568 = vsub.f32 %v553, %v564
    %v569 = vsub.f32 %v558, %v567
    %v570 = vmul.f32 %v568, 1.442695
    %v571 = vpow.pop %v570
    %v572 = vmul.f32 %v569, 1.442695
    %v573 = vpow.pop %v572
    %v574 = vsel %vm561, %v571, 0.0
    %575 = vadd.xlane.f32.xlu0 %v574
    %v576 = vpop.xlane.xlu0 %575
    %v577 = vsel %vm561, %v573, 0.0
    %578 = vadd.xlane.f32.xlu0 %v577
    %v579 = vpop.xlane.xlu0 %578
    %v580 = vlog2.pop %v576
    %v581 = vmul.f32 %v580, 0.6931472
    %v582 = vlog2.pop %v579
    %v583 = vmul.f32 %v582, 0.6931472
    %v584 = vsub.f32 %v568, %v581
    %v585 = vsub.f32 %v569, %v583
    %586 = vst.msk [vmem:[#allocation5] sm:$0xff] %vm561, %v584
    %587 = vst.msk [vmem:[#allocation5 + $0x8] sm:$0xff] %vm561, %v585
    // Predicated region
    $region26: #{tpu_custom_call.1} parent=1 // pred_check
      _
    $region27: #{tpu_custom_call.1} parent=1 // pred_check_branch
      %589 = sbr.rel (0) target = $region29
    $region28: #{tpu_custom_call.1} parent=1 // pred_region
      %s591 = ssub.s32 256, 256
      %592 = vsyncadd [#allocation4], %s591
      %s593 = sshll.u32 [#allocation5], 4
      %s594 = int_to_ptr.vmem [resolvable:$true] %s593
      %599 = dma.vmem_to_hbm [thread:$0]  %s594, 256, %s5, [#allocation4], 128, 128, 8
    $region29: #{tpu_custom_call.1} parent=1 // pred_fallthru
      _
    // Predicated region
    $region30: #{tpu_custom_call.1} parent=1 // pred_check
      _
    $region31: #{tpu_custom_call.1} parent=1 // pred_check_branch
      %601 = sbr.rel (0) target = $region33
    $region32: #{tpu_custom_call.1} parent=1 // pred_region
      %602 = dma.done [#allocation4], 256
    $region33: #{tpu_custom_call.1} parent=1 // pred_fallthru
      _
    %603 = vsyncpa [#allocation3], 1
    %604 = vsyncpa [#allocation4], 1

</llo_original>
